<compile_context>
chip_gen: v7x
topology: tpu7x:2x2x1
jax: 0.10.0
libtpu: 0.0.40
codegen_flags: <defaults>
</compile_context>

<pallas_src>
import functools

import jax
import jax.numpy as jnp
from jax import lax
from jax.experimental import pallas as pl
from jax.experimental.pallas import tpu as pltpu

LANE = 128


# ----------------------------------------------------------------------------
# Fused kernel: LoRA(CLS rows) -> classifier -> cross-entropy, single grid step.
# ----------------------------------------------------------------------------
def _lora_cls_loss_kernel(labels_ref,                       # SMEM (B,) int32 (scalar prefetch)
                          cls_ref, ab_ref, wt_ref, bias_ref,
                          logits_ref, loss_ref,
                          *, mode, num_labels, batch):
    x = cls_ref[...]                                        # (B, H) f32

    # LoRA delta with the rank dimension pre-contracted (AB = A @ B):
    # one lane-dense, H-deep MXU contraction.
    delta = jnp.dot(x, ab_ref[...], preferred_element_type=jnp.float32)  # (B, H)
    if mode == "mllora":
        # -log(softmax(x, -1)) == logsumexp(x, -1) - x   (f32 for stability)
        mx = jnp.max(x, axis=-1, keepdims=True)
        lse_x = mx + jnp.log(jnp.sum(jnp.exp(x - mx), axis=-1, keepdims=True))
        delta = delta * (lse_x - x)
    h = x + delta                                           # (B, H)

    # Classifier: label axis padded to 128 lanes (W^T / bias zero-padded).
    logits = jnp.dot(h, wt_ref[...], preferred_element_type=jnp.float32)
    logits = logits + bias_ref[...]                         # (B, Lp)
    logits_ref[...] = logits.astype(logits_ref.dtype)       # lane-dense store

    # Cross-entropy over the first `num_labels` (real) columns only.
    col = lax.broadcasted_iota(jnp.int32, logits.shape, 1)  # (B, Lp)
    valid = col < num_labels
    masked = jnp.where(valid, logits, jnp.float32(-1e30))
    m = jnp.max(masked, axis=-1, keepdims=True)
    lse = m + jnp.log(jnp.sum(jnp.exp(masked - m), axis=-1, keepdims=True))  # (B, 1)

    # Labels live in SMEM (scalar prefetch); build the per-row label matrix
    # with a short static loop over the (small) classification batch.
    row = lax.broadcasted_iota(jnp.int32, logits.shape, 0)
    lbl = jnp.zeros(logits.shape, jnp.int32)
    for b in range(batch):
        lbl = jnp.where(row == b, labels_ref[b], lbl)
    onehot = jnp.where(jnp.logical_and(col == lbl, valid),
                       jnp.float32(1.0), jnp.float32(0.0))
    picked = jnp.sum(logits * onehot, axis=-1, keepdims=True)   # (B, 1)
    nll = lse - picked                                          # (B, 1)

    # NOTE: single grid step, so the mean over the full batch is computed here.
    # If the batch were ever tiled across a grid axis this would need an
    # accumulate-then-finalize pattern with pl.when.
    loss_vec = jnp.sum(nll, axis=0, keepdims=True) / jnp.float32(batch)  # (1, 1)
    loss_ref[...] = loss_vec + jnp.zeros_like(loss_ref)      # lane-broadcast (1, Lp)


def lora_classifier_forward(cls_tok, AB, W, bias, labels, *, mode, num_labels):
    """cls_tok: (B, H) f32; AB: (H, H); W: (L, H); bias: (L,); labels: (B,) int32."""
    B, H = cls_tok.shape
    Lp = int(pl.cdiv(num_labels, LANE)) * LANE               # lane-dense label axis
    wt = jnp.zeros((H, Lp), jnp.float32).at[:, :num_labels].set(W.T)
    bias_row = jnp.zeros((1, Lp), jnp.float32).at[:, :num_labels].set(bias)

    kernel = functools.partial(_lora_cls_loss_kernel, mode=mode,
                               num_labels=num_labels, batch=B)
    logits_pad, loss_row = pl.pallas_call(
        kernel,
        out_shape=(
            jax.ShapeDtypeStruct((B, Lp), jnp.float32),
            jax.ShapeDtypeStruct((1, Lp), jnp.float32),
        ),
        grid_spec=pltpu.PrefetchScalarGridSpec(
            num_scalar_prefetch=1,                           # labels -> SMEM
            grid=(1,),                                       # single step: whole CLS block
            in_specs=[
                pl.BlockSpec((B, H), lambda i, lbl: (0, 0)),
                pl.BlockSpec((H, H), lambda i, lbl: (0, 0)),
                pl.BlockSpec((H, Lp), lambda i, lbl: (0, 0)),
                pl.BlockSpec((1, Lp), lambda i, lbl: (0, 0)),
            ],
            out_specs=(
                pl.BlockSpec((B, Lp), lambda i, lbl: (0, 0)),
                pl.BlockSpec((1, Lp), lambda i, lbl: (0, 0)),
            ),
        ),
        compiler_params=pltpu.CompilerParams(
            dimension_semantics=("arbitrary",),
            # tiny working set here; raise this (and tile rows to 512-1024) if a
            # full-sequence LoRA output is ever required downstream.
            vmem_limit_bytes=32 * 1024 * 1024,
        ),
    )(labels.astype(jnp.int32), cls_tok, AB, wt, bias_row)
    return logits_pad[:, :num_labels], loss_row[0, 0]


# ----------------------------------------------------------------------------
# Full module wrapper (synthetic backbone + fused Pallas LoRA/classifier/loss)
# ----------------------------------------------------------------------------
class BertWithLoRAPallas:
    def __init__(self, *, vocab=100, seq=8, hidden=128, rank=4,
                 num_labels=2, lora_type="basic", key=None):
        key = jax.random.PRNGKey(0) if key is None else key
        k_emb, k_pos, k_A, k_W, k_b = jax.random.split(key, 5)
        self.lora_type = lora_type
        self.hidden = hidden
        self.rank = rank
        self.num_labels = num_labels
        # synthetic backbone params (stand-in for the pretrained BERT encoder)
        self.word_emb = jax.random.normal(k_emb, (vocab, hidden), jnp.float32) * 0.02
        self.pos_emb = jax.random.normal(k_pos, (seq, hidden), jnp.float32) * 0.02
        # LoRA params: A ~ kaiming_uniform(a=sqrt(5)) -> U(-1/sqrt(rank), 1/sqrt(rank)),
        # B zero-initialized (matches LoRALayer.reset_parameters).
        bound_a = 1.0 / jnp.sqrt(rank)
        self.A = jax.random.uniform(k_A, (hidden, rank), jnp.float32,
                                    minval=-bound_a, maxval=bound_a)
        self.B = jnp.zeros((rank, hidden), jnp.float32)
        # classifier (nn.Linear(hidden, num_labels) default init)
        bound_w = 1.0 / jnp.sqrt(hidden)
        self.W = jax.random.uniform(k_W, (num_labels, hidden), jnp.float32,
                                    minval=-bound_w, maxval=bound_w)
        self.bias = jax.random.uniform(k_b, (num_labels,), jnp.float32,
                                       minval=-bound_w, maxval=bound_w)

    def __call__(self, input_ids, attention_mask, labels=None, P=None, F=None):
        Bsz, _ = input_ids.shape
        # --- synthetic "bert.bert" backbone (plain JAX glue) ---
        seq_out = self.word_emb[input_ids] + self.pos_emb[None, :, :]
        seq_out = seq_out * attention_mask[..., None].astype(jnp.float32)

        if self.lora_type not in ("basic", "mllora"):
            # TODO(synk): 'fisherlora' needs a full-sequence variance and its
            # expand()-based broadcast is only shape-consistent for degenerate
            # configs; not implemented.
            raise NotImplementedError(self.lora_type)
        # TODO(synk): externally supplied P / F are not plumbed through; 'mllora'
        # recomputes P = softmax(sequence_output) in-kernel (the module default).

        # The reference only consumes sequence_output[:, 0, :] downstream and
        # never returns the full sequence, so LoRA is applied to the CLS rows
        # only, fused with the classifier head + cross-entropy in one kernel.
        cls_tok = seq_out[:, 0, :]                            # (B, H)
        AB = jnp.matmul(self.A, self.B,
                        precision=jax.lax.Precision.HIGHEST)  # fold rank-K away
        lbl = (labels if labels is not None
               else jnp.zeros((Bsz,), jnp.int32)).astype(jnp.int32)
        logits, loss = lora_classifier_forward(
            cls_tok, AB, self.W, self.bias, lbl,
            mode=self.lora_type, num_labels=self.num_labels)

        # TODO(synk): num_labels == 1 MSE branch of the reference not implemented.
        if labels is not None:
            return loss, logits
        return logits


if __name__ == "__main__":
    key = jax.random.PRNGKey(0)
    k_ids, k_lbl, k_B = jax.random.split(key, 3)
    batch, seq, hidden, rank, num_labels, vocab = 2, 8, 128, 4, 2, 100

    input_ids = jax.random.randint(k_ids, (batch, seq), 0, vocab, dtype=jnp.int32)
    attention_mask = jnp.ones((batch, seq), jnp.int32)
    labels = jax.random.randint(k_lbl, (batch,), 0, num_labels, dtype=jnp.int32)

    hi = jax.lax.Precision.HIGHEST
    for mode in ("basic", "mllora"):
        model = BertWithLoRAPallas(vocab=vocab, seq=seq, hidden=hidden, rank=rank,
                                   num_labels=num_labels, lora_type=mode,
                                   key=jax.random.PRNGKey(0))
        # make the LoRA delta nonzero so the kernel path is genuinely exercised
        model.B = 0.01 * jax.random.normal(k_B, (rank, hidden), jnp.float32)

        loss, logits = model(input_ids, attention_mask, labels=labels)
        jax.block_until_ready((loss, logits))

        # pure-JAX reference (full-sequence LoRA, then CLS slice — equivalent)
        seq_r = model.word_emb[input_ids] + model.pos_emb[None]
        seq_r = seq_r * attention_mask[..., None].astype(jnp.float32)
        delta = jnp.matmul(jnp.matmul(seq_r, model.A, precision=hi),
                           model.B, precision=hi)
        if mode == "mllora":
            delta = delta * -jnp.log(jax.nn.softmax(seq_r, axis=-1))
        seq_r = seq_r + delta
        logits_r = jnp.matmul(seq_r[:, 0, :], model.W.T, precision=hi) + model.bias
        lse = jax.scipy.special.logsumexp(logits_r, axis=-1)
        loss_r = jnp.mean(lse - jnp.take_along_axis(logits_r, labels[:, None], 1)[:, 0])

        assert logits.shape == (batch, num_labels)
        assert jnp.allclose(logits, logits_r, atol=1e-4), (mode, logits, logits_r)
        assert jnp.allclose(loss, loss_r, atol=1e-4), (mode, loss, loss_r)

    print("KERNEL_OK")
</pallas_src>

<mosaic_0001>
module attributes {stable_mosaic.version = 11 : i64} {
  func.func @_lora_cls_loss_kernel(%arg0: i32, %arg1: memref<2xi32, #tpu.memory_space<smem>>, %arg2: memref<2x128xf32, #tpu.memory_space<vmem>>, %arg3: memref<128x128xf32, #tpu.memory_space<vmem>>, %arg4: memref<128x128xf32, #tpu.memory_space<vmem>>, %arg5: memref<1x128xf32, #tpu.memory_space<vmem>>, %arg6: memref<2x128xf32, #tpu.memory_space<vmem>>, %arg7: memref<1x128xf32, #tpu.memory_space<vmem>>) attributes {dimension_semantics = [#tpu.dimension_semantics<arbitrary>], iteration_bounds = array<i64: 1>, scalar_prefetch = 1 : i64, scratch_operands = 0 : i64, tpu.core_type = #tpu.core_type<tc>, window_params = [{pipeline_mode = #tpu.pipeline_mode<synchronous>, transform_indices = @transform_0, window_bounds = array<i64: 2, 128>}, {pipeline_mode = #tpu.pipeline_mode<synchronous>, transform_indices = @transform_1, window_bounds = array<i64: 128, 128>}, {pipeline_mode = #tpu.pipeline_mode<synchronous>, transform_indices = @transform_2, window_bounds = array<i64: 128, 128>}, {pipeline_mode = #tpu.pipeline_mode<synchronous>, transform_indices = @transform_3, window_bounds = array<i64: 1, 128>}, {pipeline_mode = #tpu.pipeline_mode<synchronous>, transform_indices = @transform_4, window_bounds = array<i64: 2, 128>}, {pipeline_mode = #tpu.pipeline_mode<synchronous>, transform_indices = @transform_5, window_bounds = array<i64: 1, 128>}]} {
    %c0 = arith.constant 0 : index
    %c0_0 = arith.constant 0 : index
    %0 = vector.load %arg2[%c0, %c0_0] : memref<2x128xf32, #tpu.memory_space<vmem>>, vector<2x128xf32>
    %c0_1 = arith.constant 0 : index
    %c0_2 = arith.constant 0 : index
    %1 = vector.load %arg3[%c0_1, %c0_2] : memref<128x128xf32, #tpu.memory_space<vmem>>, vector<128x128xf32>
    %cst = arith.constant dense<0.000000e+00> : vector<2x128xf32>
    %2 = tpu.matmul %0, %1, %cst {dimension_numbers = #tpu.dot_dimension_numbers<[1], [0], [0], [1], [0, 0, 1, 1], [], []>} : vector<2x128xf32>, vector<128x128xf32>, vector<2x128xf32> -> vector<2x128xf32>
    %3 = arith.addf %0, %2 : vector<2x128xf32>
    %c0_3 = arith.constant 0 : index
    %c0_4 = arith.constant 0 : index
    %4 = vector.load %arg4[%c0_3, %c0_4] : memref<128x128xf32, #tpu.memory_space<vmem>>, vector<128x128xf32>
    %cst_5 = arith.constant dense<0.000000e+00> : vector<2x128xf32>
    %5 = tpu.matmul %3, %4, %cst_5 {dimension_numbers = #tpu.dot_dimension_numbers<[1], [0], [0], [1], [0, 0, 1, 1], [], []>} : vector<2x128xf32>, vector<128x128xf32>, vector<2x128xf32> -> vector<2x128xf32>
    %c0_6 = arith.constant 0 : index
    %c0_7 = arith.constant 0 : index
    %6 = vector.load %arg5[%c0_6, %c0_7] : memref<1x128xf32, #tpu.memory_space<vmem>>, vector<1x128xf32>
    %7 = vector.broadcast %6 : vector<1x128xf32> to vector<2x128xf32>
    %8 = arith.addf %5, %7 : vector<2x128xf32>
    %c0_8 = arith.constant 0 : index
    %c0_9 = arith.constant 0 : index
    %9 = vector.load %arg6[%c0_8, %c0_9] : memref<2x128xf32, #tpu.memory_space<vmem>>, vector<2x128xf32>
    tpu.vector_store %arg6[%c0_8, %c0_9], %8 {strides = array<i32>} : memref<2x128xf32, #tpu.memory_space<vmem>>, vector<2x128xf32>,
    %10 = tpu.iota {dimensions = array<i32: 1>} : vector<2x128xi32>
    %c2_i32 = arith.constant 2 : i32
    %11 = vector.broadcast %c2_i32 : i32 to vector<2x128xi32>
    %12 = arith.cmpi slt, %10, %11 : vector<2x128xi32>
    %cst_10 = arith.constant -1.000000e+30 : f32
    %13 = vector.broadcast %cst_10 : f32 to vector<2x128xf32>
    %14 = arith.select %12, %8, %13 : vector<2x128xi1>, vector<2x128xf32>
    %cst_11 = arith.constant dense<0xFF800000> : vector<2xf32>
    %15 = vector.multi_reduction <maximumf>, %14, %cst_11 [1] : vector<2x128xf32> to vector<2xf32>
    %16 = vector.shape_cast %15 : vector<2xf32> to vector<2x1xf32>
    %17 = vector.broadcast %16 : vector<2x1xf32> to vector<2x128xf32>
    %18 = arith.subf %14, %17 : vector<2x128xf32>
    %19 = math.exp %18 : vector<2x128xf32>
    %cst_12 = arith.constant dense<0.000000e+00> : vector<2xf32>
    %20 = vector.multi_reduction <add>, %19, %cst_12 [1] : vector<2x128xf32> to vector<2xf32>
    %21 = vector.shape_cast %20 : vector<2xf32> to vector<2x1xf32>
    %22 = math.log %21 : vector<2x1xf32>
    %23 = arith.addf %16, %22 : vector<2x1xf32>
    %24 = tpu.iota {dimensions = array<i32: 0>} : vector<2x128xi32>
    %c0_i32 = arith.constant 0 : i32
    %25 = vector.broadcast %c0_i32 : i32 to vector<2x128xi32>
    %c0_i32_13 = arith.constant 0 : i32
    %26 = vector.broadcast %c0_i32_13 : i32 to vector<2x128xi32>
    %27 = arith.cmpi eq, %24, %26 : vector<2x128xi32>
    %c0_14 = arith.constant 0 : index
    %28 = memref.load %arg1[%c0_14] : memref<2xi32, #tpu.memory_space<smem>>
    %29 = vector.broadcast %28 : i32 to vector<2x128xi32>
    %30 = arith.select %27, %29, %25 : vector<2x128xi1>, vector<2x128xi32>
    %c1_i32 = arith.constant 1 : i32
    %31 = vector.broadcast %c1_i32 : i32 to vector<2x128xi32>
    %32 = arith.cmpi eq, %24, %31 : vector<2x128xi32>
    %c1 = arith.constant 1 : index
    %33 = memref.load %arg1[%c1] : memref<2xi32, #tpu.memory_space<smem>>
    %34 = vector.broadcast %33 : i32 to vector<2x128xi32>
    %35 = arith.select %32, %34, %30 : vector<2x128xi1>, vector<2x128xi32>
    %36 = arith.cmpi eq, %10, %35 : vector<2x128xi32>
    %37 = arith.andi %36, %12 : vector<2x128xi1>
    %cst_15 = arith.constant 1.000000e+00 : f32
    %cst_16 = arith.constant 0.000000e+00 : f32
    %38 = vector.broadcast %cst_15 : f32 to vector<2x128xf32>
    %39 = vector.broadcast %cst_16 : f32 to vector<2x128xf32>
    %40 = arith.select %37, %38, %39 : vector<2x128xi1>, vector<2x128xf32>
    %41 = arith.mulf %8, %40 : vector<2x128xf32>
    %cst_17 = arith.constant dense<0.000000e+00> : vector<2xf32>
    %42 = vector.multi_reduction <add>, %41, %cst_17 [1] : vector<2x128xf32> to vector<2xf32>
    %43 = vector.shape_cast %42 : vector<2xf32> to vector<2x1xf32>
    %44 = arith.subf %23, %43 : vector<2x1xf32>
    %cst_18 = arith.constant dense<0.000000e+00> : vector<1xf32>
    %45 = vector.multi_reduction <add>, %44, %cst_18 [0] : vector<2x1xf32> to vector<1xf32>
    %46 = vector.shape_cast %45 : vector<1xf32> to vector<1x1xf32>
    %cst_19 = arith.constant 2.000000e+00 : f32
    %47 = vector.broadcast %cst_19 : f32 to vector<1x1xf32>
    %48 = arith.divf %46, %47 : vector<1x1xf32>
    %cst_20 = arith.constant 0.000000e+00 : f32
    %49 = vector.broadcast %cst_20 : f32 to vector<1x128xf32>
    %50 = vector.broadcast %48 : vector<1x1xf32> to vector<1x128xf32>
    %51 = arith.addf %50, %49 : vector<1x128xf32>
    %c0_21 = arith.constant 0 : index
    %c0_22 = arith.constant 0 : index
    %52 = vector.load %arg7[%c0_21, %c0_22] : memref<1x128xf32, #tpu.memory_space<vmem>>, vector<1x128xf32>
    tpu.vector_store %arg7[%c0_21, %c0_22], %51 {strides = array<i32>} : memref<1x128xf32, #tpu.memory_space<vmem>>, vector<1x128xf32>,
    return
  }
  func.func @transform_0(%arg0: i32, %arg1: memref<2xi32, #tpu.memory_space<smem>>) -> (i32, i32) {
    %c0_i32 = arith.constant 0 : i32
    %c0_i32_0 = arith.constant 0 : i32
    %c0_i32_1 = arith.constant 0 : i32
    return %c0_i32, %c0_i32_0 : i32, i32
  }
  func.func @transform_1(%arg0: i32, %arg1: memref<2xi32, #tpu.memory_space<smem>>) -> (i32, i32) {
    %c0_i32 = arith.constant 0 : i32
    %c0_i32_0 = arith.constant 0 : i32
    %c0_i32_1 = arith.constant 0 : i32
    return %c0_i32, %c0_i32_0 : i32, i32
  }
  func.func @transform_2(%arg0: i32, %arg1: memref<2xi32, #tpu.memory_space<smem>>) -> (i32, i32) {
    %c0_i32 = arith.constant 0 : i32
    %c0_i32_0 = arith.constant 0 : i32
    %c0_i32_1 = arith.constant 0 : i32
    return %c0_i32, %c0_i32_0 : i32, i32
  }
  func.func @transform_3(%arg0: i32, %arg1: memref<2xi32, #tpu.memory_space<smem>>) -> (i32, i32) {
    %c0_i32 = arith.constant 0 : i32
    %c0_i32_0 = arith.constant 0 : i32
    %c0_i32_1 = arith.constant 0 : i32
    return %c0_i32, %c0_i32_0 : i32, i32
  }
  func.func @transform_4(%arg0: i32, %arg1: memref<2xi32, #tpu.memory_space<smem>>) -> (i32, i32) {
    %c0_i32 = arith.constant 0 : i32
    %c0_i32_0 = arith.constant 0 : i32
    %c0_i32_1 = arith.constant 0 : i32
    return %c0_i32, %c0_i32_0 : i32, i32
  }
  func.func @transform_5(%arg0: i32, %arg1: memref<2xi32, #tpu.memory_space<smem>>) -> (i32, i32) {
    %c0_i32 = arith.constant 0 : i32
    %c0_i32_0 = arith.constant 0 : i32
    %c0_i32_1 = arith.constant 0 : i32
    return %c0_i32, %c0_i32_0 : i32, i32
  }
}

</mosaic_0001>

<llo_original>
// kernel: tpu_custom_call.1
$region0: #{tpu_custom_call.1}
  #allocation0 [shape = 'u32[]', space=smem, size = 0x4, offset = 0x4, fixed_abs, tag = 'smem constant byte address 0x4 - core index']
  #allocation1 [shape = 'u32[144,128]{1,0:T(1,128)}', space=vmem, size = 0x12000, scoped, tag = 'internal scratch']
  #allocation2 [shape = 's32[1]{0}', space=sflag, size = 0x4, scoped, tag = 'scoped memory for tpu_custom_call.1']
  #allocation3 [shape = 'u8[512]{0}', space=smem, size = 0x200, scoped, tag = 'prefetched SMEM operand 0']
  %s0 = inlined_call_operand.hbm [shape: s32[2], index: 0, kind: input, shape index: {}]
  %s1 = inlined_call_operand.vmem [shape: f32[2,128], index: 1, kind: input, shape index: {}]
  %s2 = inlined_call_operand.hbm [shape: f32[128,128], index: 2, kind: input, shape index: {}]
  %s3 = inlined_call_operand.hbm [shape: f32[128,128], index: 3, kind: input, shape index: {}]
  %s4 = inlined_call_operand.vmem [shape: f32[1,128], index: 4, kind: input, shape index: {}]
  %s5 = inlined_call_operand.hbm [shape: f32[2,128], index: 5, kind: output, shape index: {0}]
  %s6 = inlined_call_operand.hbm [shape: f32[1,128], index: 6, kind: output, shape index: {1}]
  %7 = xla_tuple %s5, %s6
  %s8 = sld [smem:[#allocation0]]
  $region42: #{tpu_custom_call.1} parent=0
    _
  %s10 = ssub.s32 1, %s8
  %s11 = scalar_select 0, %s10, %s8
  %13 = dma.hbm_to_smem %s0, 16, [#allocation3], [#allocation2]
  %14 = dma.done [#allocation2], 16
  %15 = sfence
  $region1: #{tpu_custom_call.1} parent=0
    #allocation4 [shape = 'u8[65536]{0}', space=vmem, size = 0x10000, scoped, tag = 'input window, operand 2, single buffered']
    #allocation5 [shape = 's32[1]{0}', space=sflag, size = 0x4, scoped, tag = 'scoped memory for tpu_custom_call.1']
    #allocation6 [shape = 's32[1]{0}', space=sflag, size = 0x4, scoped, tag = 'scoped memory for tpu_custom_call.1']
    #allocation7 [shape = 'u8[65536]{0}', space=vmem, size = 0x10000, scoped, tag = 'input window, operand 3, single buffered']
    #allocation8 [shape = 's32[1]{0}', space=sflag, size = 0x4, scoped, tag = 'scoped memory for tpu_custom_call.1']
    #allocation9 [shape = 'u8[1024]{0}', space=vmem, size = 0x400, scoped, tag = 'output window, operand 0, single buffered']
    #allocation10 [shape = 'u8[512]{0}', space=vmem, size = 0x400, scoped, tag = 'output window, operand 1, single buffered']
    #allocation11 [shape = 's32[1]{0}', space=sflag, size = 0x4, scoped, tag = 'scoped memory for tpu_custom_call.1']
    %16 = vsyncpa [#allocation5], 0
    %17 = vsyncpa [#allocation8], 0
    %18 = vsyncpa [#allocation6], 0
    %19 = vsyncpa [#allocation11], 0
    // Predicated region
    $region2: #{tpu_custom_call.1} parent=1 // pred_check
      _
    $region3: #{tpu_custom_call.1} parent=1 // pred_check_branch
      %21 = sbr.rel (0) target = $region5
    $region4: #{tpu_custom_call.1} parent=1 // pred_region
      _
    $region5: #{tpu_custom_call.1} parent=1 // pred_fallthru
      _
    // Predicated region
    $region6: #{tpu_custom_call.1} parent=1 // pred_check
      _
    $region7: #{tpu_custom_call.1} parent=1 // pred_check_branch
      %23 = sbr.rel (0) target = $region9
    $region8: #{tpu_custom_call.1} parent=1 // pred_region
      %s25 = ssub.s32 2048, 2048
      %26 = vsyncadd [#allocation5], %s25
      %s27 = sshll.u32 [#allocation4], 4
      %s28 = int_to_ptr.vmem [resolvable:$true] %s27
      %33 = dma.hbm_to_vmem [thread:$0]  %s2, 2048, %s28, [#allocation5], 128, 128, 8
    $region9: #{tpu_custom_call.1} parent=1 // pred_fallthru
      _
    // Predicated region
    $region10: #{tpu_custom_call.1} parent=1 // pred_check
      _
    $region11: #{tpu_custom_call.1} parent=1 // pred_check_branch
      %35 = sbr.rel (0) target = $region13
    $region12: #{tpu_custom_call.1} parent=1 // pred_region
      %s37 = ssub.s32 2048, 2048
      %38 = vsyncadd [#allocation8], %s37
      %s39 = sshll.u32 [#allocation7], 4
      %s40 = int_to_ptr.vmem [resolvable:$true] %s39
      %45 = dma.hbm_to_vmem [thread:$0]  %s3, 2048, %s40, [#allocation8], 128, 128, 8
    $region13: #{tpu_custom_call.1} parent=1 // pred_fallthru
      _
    // Predicated region
    $region14: #{tpu_custom_call.1} parent=1 // pred_check
      _
    $region15: #{tpu_custom_call.1} parent=1 // pred_check_branch
      %47 = sbr.rel (0) target = $region17
    $region16: #{tpu_custom_call.1} parent=1 // pred_region
      _
    $region17: #{tpu_custom_call.1} parent=1 // pred_fallthru
      _
    // Predicated region
    $region18: #{tpu_custom_call.1} parent=1 // pred_check
      _
    $region19: #{tpu_custom_call.1} parent=1 // pred_check_branch
      %49 = sbr.rel (0) target = $region21
    $region20: #{tpu_custom_call.1} parent=1 // pred_region
      %50 = dma.done [#allocation5], 2048
    $region21: #{tpu_custom_call.1} parent=1 // pred_fallthru
      _
    // Predicated region
    $region22: #{tpu_custom_call.1} parent=1 // pred_check
      _
    $region23: #{tpu_custom_call.1} parent=1 // pred_check_branch
      %52 = sbr.rel (0) target = $region25
    $region24: #{tpu_custom_call.1} parent=1 // pred_region
      %53 = dma.done [#allocation8], 2048
    $region25: #{tpu_custom_call.1} parent=1 // pred_fallthru
      _
    %v54 = vld [vmem:[%s1] sm:$0x3]
    %v55 = vld [vmem:[#allocation4] sm:$0xff]
    %v56 = vld [vmem:[#allocation4 + $0x8] sm:$0xff]
    %v57 = vld [vmem:[#allocation4 + $0x10] sm:$0xff]
    %v58 = vld [vmem:[#allocation4 + $0x18] sm:$0xff]
    %v59 = vld [vmem:[#allocation4 + $0x20] sm:$0xff]
    %v60 = vld [vmem:[#allocation4 + $0x28] sm:$0xff]
    %v61 = vld [vmem:[#allocation4 + $0x30] sm:$0xff]
    %v62 = vld [vmem:[#allocation4 + $0x38] sm:$0xff]
    %v63 = vld [vmem:[#allocation4 + $0x40] sm:$0xff]
    %v64 = vld [vmem:[#allocation4 + $0x48] sm:$0xff]
    %v65 = vld [vmem:[#allocation4 + $0x50] sm:$0xff]
    %v66 = vld [vmem:[#allocation4 + $0x58] sm:$0xff]
    %v67 = vld [vmem:[#allocation4 + $0x60] sm:$0xff]
    %v68 = vld [vmem:[#allocation4 + $0x68] sm:$0xff]
    %v69 = vld [vmem:[#allocation4 + $0x70] sm:$0xff]
    %v70 = vld [vmem:[#allocation4 + $0x78] sm:$0xff]
    %71 = vmatprep.subr.mxu0 0.0
    %72 = vmatpush1.msra.mxu0 %v55
    %73 = vmatprep.subr.mxu0 0.0
    %74 = vmatpush1.msra.mxu0 %v56
    %75 = vmatprep.subr.mxu0 0.0
    %76 = vmatpush1.msra.mxu0 %v57
    %77 = vmatprep.subr.mxu0 0.0
    %78 = vmatpush1.msra.mxu0 %v58
    %79 = vmatprep.subr.mxu0 0.0
    %80 = vmatpush1.msra.mxu0 %v59
    %81 = vmatprep.subr.mxu0 0.0
    %82 = vmatpush1.msra.mxu0 %v60
    %83 = vmatprep.subr.mxu0 0.0
    %84 = vmatpush1.msra.mxu0 %v61
    %85 = vmatprep.subr.mxu0 0.0
    %86 = vmatpush1.msra.mxu0 %v62
    %87 = vmatprep.subr.mxu0 0.0
    %88 = vmatpush1.msra.mxu0 %v63
    %89 = vmatprep.subr.mxu0 0.0
    %90 = vmatpush1.msra.mxu0 %v64
    %91 = vmatprep.subr.mxu0 0.0
    %92 = vmatpush1.msra.mxu0 %v65
    %93 = vmatprep.subr.mxu0 0.0
    %94 = vmatpush1.msra.mxu0 %v66
    %95 = vmatprep.subr.mxu0 0.0
    %96 = vmatpush1.msra.mxu0 %v67
    %97 = vmatprep.subr.mxu0 0.0
    %98 = vmatpush1.msra.mxu0 %v68
    %99 = vmatprep.subr.mxu0 0.0
    %100 = vmatpush1.msra.mxu0 %v69
    %101 = vmatprep.subr.mxu0 0.0
    %102 = vmatpush1.msra.mxu0 %v70
    %103 = vmatprep.subr.mxu0 0.0
    %104 = vmatpush1.msra.mxu0 0.0
    %105 = vmatprep.subr.mxu0 0.0
    %106 = vmatpush1.msra.mxu0 0.0
    %107 = vmatprep.subr.mxu0 0.0
    %108 = vmatpush1.msra.mxu0 0.0
    %109 = vmatprep.subr.mxu0 0.0
    %110 = vmatpush1.msra.mxu0 0.0
    %111 = vmatprep.subr.mxu0 0.0
    %112 = vmatpush1.msra.mxu0 0.0
    %113 = vmatprep.subr.mxu0 0.0
    %114 = vmatpush1.msra.mxu0 0.0
    %115 = vmatprep.subr.mxu0 0.0
    %116 = vmatpush1.msra.mxu0 0.0
    %117 = vmatprep.subr.mxu0 0.0
    %118 = vmatpush1.msra.mxu0 0.0
    %119 = vmatprep.subr.mxu0 0.0
    %120 = vmatpush1.msra.mxu0 0.0
    %121 = vmatprep.subr.mxu0 0.0
    %122 = vmatpush1.msra.mxu0 0.0
    %123 = vmatprep.subr.mxu0 0.0
    %124 = vmatpush1.msra.mxu0 0.0
    %125 = vmatprep.subr.mxu0 0.0
    %126 = vmatpush1.msra.mxu0 0.0
    %127 = vmatprep.subr.mxu0 0.0
    %128 = vmatpush1.msra.mxu0 0.0
    %129 = vmatprep.subr.mxu0 0.0
    %130 = vmatpush1.msra.mxu0 0.0
    %131 = vmatprep.subr.mxu0 0.0
    %132 = vmatpush1.msra.mxu0 0.0
    %133 = vmatprep.subr.mxu0 0.0
    %134 = vmatpush1.msra.mxu0 0.0
    %135 = vmatprep.mubr.f32.mxu0 0.0
    %136 = vmatmul.mubr.f32.gmra.mrb[0].mxu0 %v54
    %v137 = vpop.f32.mrb[0].mxu0
    %v138 = vadd.f32 0.0, %v137
    %v139 = vpop.f32.mrb[0].mxu0
    %140 = vdwg.mxu0
    %v141 = vadd.f32 %v54, %v138
    %v142 = vld [vmem:[#allocation7] sm:$0xff]
    %v143 = vld [vmem:[#allocation7 + $0x8] sm:$0xff]
    %v144 = vld [vmem:[#allocation7 + $0x10] sm:$0xff]
    %v145 = vld [vmem:[#allocation7 + $0x18] sm:$0xff]
    %v146 = vld [vmem:[#allocation7 + $0x20] sm:$0xff]
    %v147 = vld [vmem:[#allocation7 + $0x28] sm:$0xff]
    %v148 = vld [vmem:[#allocation7 + $0x30] sm:$0xff]
    %v149 = vld [vmem:[#allocation7 + $0x38] sm:$0xff]
    %v150 = vld [vmem:[#allocation7 + $0x40] sm:$0xff]
    %v151 = vld [vmem:[#allocation7 + $0x48] sm:$0xff]
    %v152 = vld [vmem:[#allocation7 + $0x50] sm:$0xff]
    %v153 = vld [vmem:[#allocation7 + $0x58] sm:$0xff]
    %v154 = vld [vmem:[#allocation7 + $0x60] sm:$0xff]
    %v155 = vld [vmem:[#allocation7 + $0x68] sm:$0xff]
    %v156 = vld [vmem:[#allocation7 + $0x70] sm:$0xff]
    %v157 = vld [vmem:[#allocation7 + $0x78] sm:$0xff]
    %v158 = vld [vmem:[%s4] sm:$0x1]
    %v160 = vlaneseq
    %v161 = vshrl.u32 %v160, 7
    %v162 = vsub.s32 0, %v161
    %v163 = vrot.slane %v158, %v162
    %165 = vmatprep.subr.mxu0 0.0
    %166 = vmatpush1.msra.mxu0 %v142
    %167 = vmatprep.subr.mxu0 0.0
    %168 = vmatpush1.msra.mxu0 %v143
    %169 = vmatprep.subr.mxu0 0.0
    %170 = vmatpush1.msra.mxu0 %v144
    %171 = vmatprep.subr.mxu0 0.0
    %172 = vmatpush1.msra.mxu0 %v145
    %173 = vmatprep.subr.mxu0 0.0
    %174 = vmatpush1.msra.mxu0 %v146
    %175 = vmatprep.subr.mxu0 0.0
    %176 = vmatpush1.msra.mxu0 %v147
    %177 = vmatprep.subr.mxu0 0.0
    %178 = vmatpush1.msra.mxu0 %v148
    %179 = vmatprep.subr.mxu0 0.0
    %180 = vmatpush1.msra.mxu0 %v149
    %181 = vmatprep.subr.mxu0 0.0
    %182 = vmatpush1.msra.mxu0 %v150
    %183 = vmatprep.subr.mxu0 0.0
    %184 = vmatpush1.msra.mxu0 %v151
    %185 = vmatprep.subr.mxu0 0.0
    %186 = vmatpush1.msra.mxu0 %v152
    %187 = vmatprep.subr.mxu0 0.0
    %188 = vmatpush1.msra.mxu0 %v153
    %189 = vmatprep.subr.mxu0 0.0
    %190 = vmatpush1.msra.mxu0 %v154
    %191 = vmatprep.subr.mxu0 0.0
    %192 = vmatpush1.msra.mxu0 %v155
    %193 = vmatprep.subr.mxu0 0.0
    %194 = vmatpush1.msra.mxu0 %v156
    %195 = vmatprep.subr.mxu0 0.0
    %196 = vmatpush1.msra.mxu0 %v157
    %197 = vmatprep.subr.mxu0 0.0
    %198 = vmatpush1.msra.mxu0 0.0
    %199 = vmatprep.subr.mxu0 0.0
    %200 = vmatpush1.msra.mxu0 0.0
    %201 = vmatprep.subr.mxu0 0.0
    %202 = vmatpush1.msra.mxu0 0.0
    %203 = vmatprep.subr.mxu0 0.0
    %204 = vmatpush1.msra.mxu0 0.0
    %205 = vmatprep.subr.mxu0 0.0
    %206 = vmatpush1.msra.mxu0 0.0
    %207 = vmatprep.subr.mxu0 0.0
    %208 = vmatpush1.msra.mxu0 0.0
    %209 = vmatprep.subr.mxu0 0.0
    %210 = vmatpush1.msra.mxu0 0.0
    %211 = vmatprep.subr.mxu0 0.0
    %212 = vmatpush1.msra.mxu0 0.0
    %213 = vmatprep.subr.mxu0 0.0
    %214 = vmatpush1.msra.mxu0 0.0
    %215 = vmatprep.subr.mxu0 0.0
    %216 = vmatpush1.msra.mxu0 0.0
    %217 = vmatprep.subr.mxu0 0.0
    %218 = vmatpush1.msra.mxu0 0.0
    %219 = vmatprep.subr.mxu0 0.0
    %220 = vmatpush1.msra.mxu0 0.0
    %221 = vmatprep.subr.mxu0 0.0
    %222 = vmatpush1.msra.mxu0 0.0
    %223 = vmatprep.subr.mxu0 0.0
    %224 = vmatpush1.msra.mxu0 0.0
    %225 = vmatprep.subr.mxu0 0.0
    %226 = vmatpush1.msra.mxu0 0.0
    %227 = vmatprep.subr.mxu0 0.0
    %228 = vmatpush1.msra.mxu0 0.0
    %229 = vmatprep.mubr.f32.mxu0 0.0
    %230 = vmatmul.mubr.f32.gmra.mrb[0].mxu0 %v141
    %v231 = vpop.f32.mrb[0].mxu0
    %v232 = vadd.f32 %v163, %v231
    %v233 = vpop.f32.mrb[0].mxu0
    %234 = vdwg.mxu0
    %235 = vst [vmem:[#allocation9] sm:$0x3] %v232
    %v236 = vlaneseq
    %v237 = vand.u32 %v236, 127
    %vm238 = vcmp.lt.s32.totalorder %v237, 2
    %v239 = vsel %vm238, %v232, -1e+30
    %vm240 = vcmask 1041408
    %v241 = vsel %vm240, %v239, -inf
    %242 = vmax.xlane.f32.xlu0 %v241
    %v243 = vpop.xlane.xlu0 %242
    %v244 = vsub.f32 %v239, %v243
    %v245 = vmul.f32 %v244, 1.442695
    %v246 = vpow.pop %v245
    %v247 = vsel %vm240, %v246, 0.0
    %248 = vadd.xlane.f32.xlu0 %v247
    %v249 = vpop.xlane.xlu0 %248
    %v250 = vlog2.pop %v249
    %v251 = vmul.f32 %v250, 0.6931472
    %v252 = vadd.f32 %v243, %v251
    %v253 = vlaneseq
    %v254 = vshrl.u32 %v253, 7
    %vm255 = vcmp.eq.s32.totalorder %v254, 0
    %s256 = sld [smem:[#allocation3]]
    %v257 = vstv %s256
    %v258 = vsel %vm255, %v257, 0
    %vm259 = vcmp.eq.s32.totalorder %v254, 1
    %s260 = sld [smem:[#allocation3 + $0x1]]
    %v261 = vstv %s260
    %v262 = vsel %vm259, %v261, %v258
    %vm263 = vcmp.eq.s32.totalorder %v237, %v262
    %vm264 = vmand %vm263, %vm238
    %v265 = vsel %vm264, 1.0, 0.0
    %v266 = vmul.f32 %v232, %v265
    %v267 = vsel %vm240, %v266, 0.0
    %268 = vadd.xlane.f32.xlu0 %v267
    %v269 = vpop.xlane.xlu0 %268
    %v270 = vsub.f32 %v252, %v269
    %v271 = vsel %vm240, %v270, 0.0
    %v272 = vrot.slane %v271, 4
    %v273 = vadd.f32 %v271, %v272
    %v274 = vrot.slane %v273, 2
    %v275 = vadd.f32 %v273, %v274
    %v276 = vrot.slane %v275, 1
    %v277 = vadd.f32 %v275, %v276
    %v278 = vrcp.pop 2.0
    %v279 = vmul.f32 %v277, %v278
    %v280 = vadd.f32 %v279, 0.0
    %281 = vst [vmem:[#allocation10] sm:$0x1] %v280
    // Predicated region
    $region26: #{tpu_custom_call.1} parent=1 // pred_check
      _
    $region27: #{tpu_custom_call.1} parent=1 // pred_check_branch
      %283 = sbr.rel (0) target = $region29
    $region28: #{tpu_custom_call.1} parent=1 // pred_region
      %s285 = ssub.s32 32, 32
      %286 = vsyncadd [#allocation6], %s285
      %s288 = sshll.u32 [#allocation9], 4
      %s289 = int_to_ptr.vmem [resolvable:$true] %s288
      %291 = dma.vmem_to_hbm [thread:$0]  %s289, 32, %s5, [#allocation6]
    $region29: #{tpu_custom_call.1} parent=1 // pred_fallthru
      _
    // Predicated region
    $region30: #{tpu_custom_call.1} parent=1 // pred_check
      _
    $region31: #{tpu_custom_call.1} parent=1 // pred_check_branch
      %293 = sbr.rel (0) target = $region33
    $region32: #{tpu_custom_call.1} parent=1 // pred_region
      %s295 = ssub.s32 16, 16
      %296 = vsyncadd [#allocation11], %s295
      %s298 = sshll.u32 [#allocation10], 4
      %s299 = int_to_ptr.vmem [resolvable:$true] %s298
      %301 = dma.vmem_to_hbm [thread:$0]  %s299, 16, %s6, [#allocation11]
    $region33: #{tpu_custom_call.1} parent=1 // pred_fallthru
      _
    // Predicated region
    $region34: #{tpu_custom_call.1} parent=1 // pred_check
      _
    $region35: #{tpu_custom_call.1} parent=1 // pred_check_branch
      %303 = sbr.rel (0) target = $region37
    $region36: #{tpu_custom_call.1} parent=1 // pred_region
      %304 = dma.done [#allocation6], 32
    $region37: #{tpu_custom_call.1} parent=1 // pred_fallthru
      _
    // Predicated region
    $region38: #{tpu_custom_call.1} parent=1 // pred_check
      _
    $region39: #{tpu_custom_call.1} parent=1 // pred_check_branch
      %306 = sbr.rel (0) target = $region41
    $region40: #{tpu_custom_call.1} parent=1 // pred_region
      %307 = dma.done [#allocation11], 16
    $region41: #{tpu_custom_call.1} parent=1 // pred_fallthru
      _
    %308 = vsyncpa [#allocation5], 1
    %309 = vsyncpa [#allocation8], 1
    %310 = vsyncpa [#allocation6], 1
    %311 = vsyncpa [#allocation11], 1

</llo_original>
